<compile_context>
chip_gen: v7x
topology: tpu7x:2x2x1
jax: 0.10.0
libtpu: 0.0.40
codegen_flags: <defaults>
</compile_context>

<pallas_src>
import jax
import jax.numpy as jnp
from jax.experimental import pallas as pl
from jax.experimental.pallas import tpu as pltpu


def _round_up(n, m):
    return ((n + m - 1) // m) * m


def fraudnet_kernel(xT_ref, w1_ref, b1_ref, w2_ref, b2_ref, w3_ref, b3_ref, o_ref):
    # xT_ref: (F, TM)        batch on lanes everywhere
    # w1: (64, F)  b1: (64, 1)
    # w2: (32, 64) b2: (32, 1)
    # w3: (32, 1)  b3: (1, 1)
    # o_ref: (1, TM) f32

    xT = xT_ref[...]  # already bf16 (or f32) from the wrapper

    # Layer 1: (64, F) @ (F, TM) -> (64, TM); MXU matmul, f32 accumulation.
    h1 = jnp.dot(w1_ref[...], xT, preferred_element_type=jnp.float32)
    h1 = jnp.maximum(h1 + b1_ref[...], 0.0)

    # Layer 2: (32, 64) @ (64, TM) -> (32, TM); MXU matmul, f32 accumulation.
    h2 = jnp.dot(w2_ref[...], h1.astype(w2_ref.dtype),
                 preferred_element_type=jnp.float32)
    h2 = jnp.maximum(h2 + b2_ref[...], 0.0)

    # Layer 3 (32 -> 1): broadcast-multiply on the VPU + 32-row sublane reduce on
    # the XLU; the result is already a lane-dense (1, TM) slab.
    z = jnp.sum(h2 * w3_ref[...], axis=0, keepdims=True) + b3_ref[...]

    # Sigmoid: exp and approximate reciprocal both run in the EUP slot.
    o_ref[...] = pl.reciprocal(1.0 + jnp.exp(-z), approx=True)


def fraudnet_forward(x, params, *, block_cols=4096, use_bf16=True):
    """Forward pass of FraudNet via a single fused Pallas kernel.

    x: (B, F) float32. params in PyTorch layout (w: (out, in), b: (out,)).
    Returns (B, 1) float32 probabilities.
    """
    w1, b1, w2, b2, w3, b3 = params
    B, F = x.shape

    # One transpose pass over x in HBM puts the batch on the lane/N side of the
    # MXU (the kernel is MXU-push-bound, so this is a clear net win).
    xT = x.T
    if use_bf16:
        # NOTE: casts the features to bf16; for raw, unnormalized fraud features
        # with large dynamic range, validate or pass use_bf16=False.
        xT = xT.astype(jnp.bfloat16)
        w1 = w1.astype(jnp.bfloat16)
        w2 = w2.astype(jnp.bfloat16)

    b1c = b1.reshape(-1, 1).astype(jnp.float32)     # (64, 1)
    b2c = b2.reshape(-1, 1).astype(jnp.float32)     # (32, 1)
    w3c = w3.reshape(1, -1).T.astype(jnp.float32)   # (32, 1)
    b3c = b3.reshape(1, 1).astype(jnp.float32)      # (1, 1)

    # Tile selection (batch lives on the lane axis):
    #  * tiny batches: one full-extent tile (no 128-alignment requirement).
    #  * otherwise: at least 2 tiles (keeps v7x's second TensorCore busy),
    #    lane-aligned to 128, capped at block_cols.  No padding — the grid is
    #    cdiv(B, tm) and the OOB tail of the last tile is computed-and-discarded.
    if B <= 256:
        tm = B
    else:
        tm = min(_round_up(block_cols, 128), _round_up(pl.cdiv(B, 2), 128))
    grid = (pl.cdiv(B, tm),)

    # Advisory cost hint for the XLA scheduler.
    flops = 2 * B * (F * 64 + 64 * 32 + 32)
    bytes_accessed = (
        xT.size * xT.dtype.itemsize + B * 4
        + w1.size * w1.dtype.itemsize + w2.size * w2.dtype.itemsize
        + (b1c.size + b2c.size + w3c.size + b3c.size) * 4
    )

    # Constant index maps keep the six weight/bias arrays VMEM-resident across
    # grid steps (Pallas skips re-DMA when the block index does not change).
    const = lambda a: pl.BlockSpec(a.shape, lambda i: (0, 0))

    out = pl.pallas_call(
        fraudnet_kernel,
        out_shape=jax.ShapeDtypeStruct((1, B), jnp.float32),
        grid=grid,
        in_specs=[
            pl.BlockSpec((F, tm), lambda i: (0, i)),   # xT: streamed along lanes
            const(w1), const(b1c),
            const(w2), const(b2c),
            const(w3c), const(b3c),
        ],
        out_specs=pl.BlockSpec((1, tm), lambda i: (0, i)),  # lane-dense output slab
        compiler_params=pltpu.CompilerParams(
            dimension_semantics=("parallel",),  # shard batch tiles across TCs (v7x)
        ),
        cost_estimate=pl.CostEstimate(
            flops=flops, transcendentals=B, bytes_accessed=bytes_accessed),
    )(xT, w1, b1c, w2, b2c, w3c, b3c)

    # (1, B) lane-dense slab -> (B, 1) column.
    return out.reshape(B, 1)


def init_params(key, input_size):
    """Deterministic init mimicking PyTorch's default Linear init
    (uniform(-1/sqrt(fan_in), 1/sqrt(fan_in))).  PyTorch layout: w (out, in)."""
    def linear(key, fan_in, fan_out):
        kw, kb = jax.random.split(key)
        bound = 1.0 / jnp.sqrt(float(fan_in))
        w = jax.random.uniform(kw, (fan_out, fan_in), jnp.float32, -bound, bound)
        b = jax.random.uniform(kb, (fan_out,), jnp.float32, -bound, bound)
        return w, b

    k1, k2, k3 = jax.random.split(key, 3)
    w1, b1 = linear(k1, input_size, 64)
    w2, b2 = linear(k2, 64, 32)
    w3, b3 = linear(k3, 32, 1)
    return (w1, b1, w2, b2, w3, b3)


def fraudnet_reference(x, params):
    """Pure-JAX reference of the PyTorch forward pass."""
    w1, b1, w2, b2, w3, b3 = params
    h1 = jnp.maximum(x @ w1.T + b1, 0.0)
    h2 = jnp.maximum(h1 @ w2.T + b2, 0.0)
    return jax.nn.sigmoid(h2 @ w3.T + b3)


if __name__ == "__main__":
    key = jax.random.PRNGKey(0)
    kx, kp, kx2 = jax.random.split(key, 3)

    input_size = 30  # typical credit-card fraud feature count
    params = init_params(kp, input_size)

    # Small, single full-extent tile.
    batch = 8
    x = jax.random.normal(kx, (batch, input_size), dtype=jnp.float32)
    ref = fraudnet_reference(x, params)

    # Default path (bf16 matmuls, f32 accumulation, approx-reciprocal sigmoid).
    out = jax.block_until_ready(fraudnet_forward(x, params))
    assert out.shape == (batch, 1)
    assert jnp.allclose(out, ref, atol=2e-2, rtol=2e-2), "bf16 path mismatch"

    # Full-f32 matmul path: only the EUP approximate reciprocal differs.
    out_f32 = jax.block_until_ready(fraudnet_forward(x, params, use_bf16=False))
    assert jnp.allclose(out_f32, ref, atol=2e-3, rtol=2e-3), "f32 path mismatch"

    # Multi-tile, non-divisible batch: exercises the pad-free cdiv grid with a
    # masked OOB tail and the >=2-tile split used for v7x's second TensorCore.
    batch2 = 300
    x2 = jax.random.normal(kx2, (batch2, input_size), dtype=jnp.float32)
    out2 = jax.block_until_ready(fraudnet_forward(x2, params))
    ref2 = fraudnet_reference(x2, params)
    assert out2.shape == (batch2, 1)
    assert jnp.allclose(out2, ref2, atol=2e-2, rtol=2e-2), "multi-tile mismatch"

    print("KERNEL_OK")
</pallas_src>

<mosaic_0001>
module attributes {stable_mosaic.version = 11 : i64} {
  func.func @fraudnet_kernel(%arg0: i32, %arg1: memref<30x8xbf16, #tpu.memory_space<vmem>>, %arg2: memref<64x30xbf16, #tpu.memory_space<vmem>>, %arg3: memref<64x1xf32, #tpu.memory_space<vmem>>, %arg4: memref<32x64xbf16, #tpu.memory_space<vmem>>, %arg5: memref<32x1xf32, #tpu.memory_space<vmem>>, %arg6: memref<32x1xf32, #tpu.memory_space<vmem>>, %arg7: memref<1x1xf32, #tpu.memory_space<vmem>>, %arg8: memref<1x8xf32, #tpu.memory_space<vmem>>) attributes {dimension_semantics = [#tpu.dimension_semantics<parallel>], iteration_bounds = array<i64: 1>, scalar_prefetch = 0 : i64, scratch_operands = 0 : i64, tpu.core_type = #tpu.core_type<tc>, window_params = [{transform_indices = @transform_0, window_bounds = array<i64: 30, 8>}, {pipeline_mode = #tpu.pipeline_mode<synchronous>, transform_indices = @transform_1, window_bounds = array<i64: 64, 30>}, {pipeline_mode = #tpu.pipeline_mode<synchronous>, transform_indices = @transform_2, window_bounds = array<i64: 64, 1>}, {pipeline_mode = #tpu.pipeline_mode<synchronous>, transform_indices = @transform_3, window_bounds = array<i64: 32, 64>}, {pipeline_mode = #tpu.pipeline_mode<synchronous>, transform_indices = @transform_4, window_bounds = array<i64: 32, 1>}, {pipeline_mode = #tpu.pipeline_mode<synchronous>, transform_indices = @transform_5, window_bounds = array<i64: 32, 1>}, {pipeline_mode = #tpu.pipeline_mode<synchronous>, transform_indices = @transform_6, window_bounds = array<i64: 1, 1>}, {transform_indices = @transform_7, window_bounds = array<i64: 1, 8>}]} {
    %c0 = arith.constant 0 : index
    %c0_0 = arith.constant 0 : index
    %0 = vector.load %arg1[%c0, %c0_0] : memref<30x8xbf16, #tpu.memory_space<vmem>>, vector<30x8xbf16>
    %c0_1 = arith.constant 0 : index
    %c0_2 = arith.constant 0 : index
    %1 = vector.load %arg2[%c0_1, %c0_2] : memref<64x30xbf16, #tpu.memory_space<vmem>>, vector<64x30xbf16>
    %cst = arith.constant dense<0.000000e+00> : vector<64x8xf32>
    %2 = tpu.matmul %1, %0, %cst {dimension_numbers = #tpu.dot_dimension_numbers<[1], [0], [0], [1], [0, 0, 1, 1], [], []>} : vector<64x30xbf16>, vector<30x8xbf16>, vector<64x8xf32> -> vector<64x8xf32>
    %c0_3 = arith.constant 0 : index
    %c0_4 = arith.constant 0 : index
    %3 = vector.load %arg3[%c0_3, %c0_4] : memref<64x1xf32, #tpu.memory_space<vmem>>, vector<64x1xf32>
    %4 = vector.broadcast %3 : vector<64x1xf32> to vector<64x8xf32>
    %5 = arith.addf %2, %4 : vector<64x8xf32>
    %cst_5 = arith.constant 0.000000e+00 : f32
    %6 = vector.broadcast %cst_5 : f32 to vector<64x8xf32>
    %7 = arith.maximumf %5, %6 : vector<64x8xf32>
    %c0_6 = arith.constant 0 : index
    %c0_7 = arith.constant 0 : index
    %8 = vector.load %arg4[%c0_6, %c0_7] : memref<32x64xbf16, #tpu.memory_space<vmem>>, vector<32x64xbf16>
    %9 = arith.truncf %7 : vector<64x8xf32> to vector<64x8xbf16>
    %cst_8 = arith.constant dense<0.000000e+00> : vector<32x8xf32>
    %10 = tpu.matmul %8, %9, %cst_8 {dimension_numbers = #tpu.dot_dimension_numbers<[1], [0], [0], [1], [0, 0, 1, 1], [], []>} : vector<32x64xbf16>, vector<64x8xbf16>, vector<32x8xf32> -> vector<32x8xf32>
    %c0_9 = arith.constant 0 : index
    %c0_10 = arith.constant 0 : index
    %11 = vector.load %arg5[%c0_9, %c0_10] : memref<32x1xf32, #tpu.memory_space<vmem>>, vector<32x1xf32>
    %12 = vector.broadcast %11 : vector<32x1xf32> to vector<32x8xf32>
    %13 = arith.addf %10, %12 : vector<32x8xf32>
    %cst_11 = arith.constant 0.000000e+00 : f32
    %14 = vector.broadcast %cst_11 : f32 to vector<32x8xf32>
    %15 = arith.maximumf %13, %14 : vector<32x8xf32>
    %c0_12 = arith.constant 0 : index
    %c0_13 = arith.constant 0 : index
    %16 = vector.load %arg6[%c0_12, %c0_13] : memref<32x1xf32, #tpu.memory_space<vmem>>, vector<32x1xf32>
    %17 = vector.broadcast %16 : vector<32x1xf32> to vector<32x8xf32>
    %18 = arith.mulf %15, %17 : vector<32x8xf32>
    %cst_14 = arith.constant dense<0.000000e+00> : vector<8xf32>
    %19 = vector.multi_reduction <add>, %18, %cst_14 [0] : vector<32x8xf32> to vector<8xf32>
    %20 = vector.shape_cast %19 : vector<8xf32> to vector<1x8xf32>
    %c0_15 = arith.constant 0 : index
    %c0_16 = arith.constant 0 : index
    %21 = vector.load %arg7[%c0_15, %c0_16] : memref<1x1xf32, #tpu.memory_space<vmem>>, vector<1x1xf32>
    %22 = vector.broadcast %21 : vector<1x1xf32> to vector<1x8xf32>
    %23 = arith.addf %20, %22 : vector<1x8xf32>
    %cst_17 = arith.constant 0.000000e+00 : f32
    %24 = vector.broadcast %cst_17 : f32 to vector<1x8xf32>
    %25 = arith.subf %24, %23 : vector<1x8xf32>
    %26 = math.exp %25 : vector<1x8xf32>
    %cst_18 = arith.constant 1.000000e+00 : f32
    %27 = vector.broadcast %cst_18 : f32 to vector<1x8xf32>
    %28 = arith.addf %27, %26 : vector<1x8xf32>
    %29 = tpu.reciprocal %28 {approx = true} : vector<1x8xf32> -> vector<1x8xf32>
    %c0_19 = arith.constant 0 : index
    %c0_20 = arith.constant 0 : index
    %30 = vector.load %arg8[%c0_19, %c0_20] : memref<1x8xf32, #tpu.memory_space<vmem>>, vector<1x8xf32>
    tpu.vector_store %arg8[%c0_19, %c0_20], %29 {strides = array<i32>} : memref<1x8xf32, #tpu.memory_space<vmem>>, vector<1x8xf32>,
    return
  }
  func.func @transform_0(%arg0: i32) -> (i32, i32) {
    %c0_i32 = arith.constant 0 : i32
    %c0_i32_0 = arith.constant 0 : i32
    return %c0_i32, %arg0 : i32, i32
  }
  func.func @transform_1(%arg0: i32) -> (i32, i32) {
    %c0_i32 = arith.constant 0 : i32
    %c0_i32_0 = arith.constant 0 : i32
    %c0_i32_1 = arith.constant 0 : i32
    return %c0_i32, %c0_i32_0 : i32, i32
  }
  func.func @transform_2(%arg0: i32) -> (i32, i32) {
    %c0_i32 = arith.constant 0 : i32
    %c0_i32_0 = arith.constant 0 : i32
    %c0_i32_1 = arith.constant 0 : i32
    return %c0_i32, %c0_i32_0 : i32, i32
  }
  func.func @transform_3(%arg0: i32) -> (i32, i32) {
    %c0_i32 = arith.constant 0 : i32
    %c0_i32_0 = arith.constant 0 : i32
    %c0_i32_1 = arith.constant 0 : i32
    return %c0_i32, %c0_i32_0 : i32, i32
  }
  func.func @transform_4(%arg0: i32) -> (i32, i32) {
    %c0_i32 = arith.constant 0 : i32
    %c0_i32_0 = arith.constant 0 : i32
    %c0_i32_1 = arith.constant 0 : i32
    return %c0_i32, %c0_i32_0 : i32, i32
  }
  func.func @transform_5(%arg0: i32) -> (i32, i32) {
    %c0_i32 = arith.constant 0 : i32
    %c0_i32_0 = arith.constant 0 : i32
    %c0_i32_1 = arith.constant 0 : i32
    return %c0_i32, %c0_i32_0 : i32, i32
  }
  func.func @transform_6(%arg0: i32) -> (i32, i32) {
    %c0_i32 = arith.constant 0 : i32
    %c0_i32_0 = arith.constant 0 : i32
    %c0_i32_1 = arith.constant 0 : i32
    return %c0_i32, %c0_i32_0 : i32, i32
  }
  func.func @transform_7(%arg0: i32) -> (i32, i32) {
    %c0_i32 = arith.constant 0 : i32
    %c0_i32_0 = arith.constant 0 : i32
    return %c0_i32, %arg0 : i32, i32
  }
}

</mosaic_0001>

<llo_original>
// kernel: tpu_custom_call.1
$region0: #{tpu_custom_call.1}
  #allocation0 [shape = 'u32[]', space=smem, size = 0x4, offset = 0x4, fixed_abs, tag = 'smem constant byte address 0x4 - core index']
  #allocation1 [shape = 'u32[144,128]{1,0:T(1,128)}', space=vmem, size = 0x12000, scoped, tag = 'internal scratch']
  #allocation2 [shape = 'f32[1,1]{1,0:T(1,128)S(1)}', space=vmem, size = 0x200, scoped, tag = 'scoped memory for tpu_custom_call.1']
  %s0 = inlined_call_operand.vmem [shape: bf16[30,8], index: 0, kind: input, shape index: {}]
  %s1 = inlined_call_operand.vmem [shape: bf16[64,30], index: 1, kind: input, shape index: {}]
  %s2 = inlined_call_operand.vmem [shape: f32[64,1], index: 2, kind: input, shape index: {}]
  %s3 = inlined_call_operand.vmem [shape: bf16[32,64], index: 3, kind: input, shape index: {}]
  %s4 = inlined_call_operand.vmem [shape: f32[32,1], index: 4, kind: input, shape index: {}]
  %s5 = inlined_call_operand.vmem [shape: f32[32,1], index: 5, kind: input, shape index: {}]
  %s6 = inlined_call_operand.<no memory space> [shape: f32[1,1], index: 6, kind: input, shape index: {}]
  %s7 = inlined_call_operand.hbm [shape: f32[1,8], index: 7, kind: output, shape index: {}]
  %s8 = sld [smem:[#allocation0]]
  $region38: #{tpu_custom_call.1} parent=0
    _
  %s10 = ssub.s32 1, %s8
  %s11 = scalar_select 0, %s10, %s8
  %v12 = vstv %s6
  %13 = vst [vmem:[#allocation2] sm:$0x1] %v12
  $region1: #{tpu_custom_call.1} parent=0
    #allocation3 [shape = 'u8[512]{0}', space=vmem, size = 0x400, scoped, tag = 'output window, operand 0, single buffered']
    #allocation4 [shape = 's32[1]{0}', space=sflag, size = 0x4, scoped, tag = 'scoped memory for tpu_custom_call.1']
    %14 = vsyncpa [#allocation4], 0
    // Predicated region
    $region2: #{tpu_custom_call.1} parent=1 // pred_check
      _
    $region3: #{tpu_custom_call.1} parent=1 // pred_check_branch
      %16 = sbr.rel (0) target = $region5
    $region4: #{tpu_custom_call.1} parent=1 // pred_region
      _
    $region5: #{tpu_custom_call.1} parent=1 // pred_fallthru
      _
    // Predicated region
    $region6: #{tpu_custom_call.1} parent=1 // pred_check
      _
    $region7: #{tpu_custom_call.1} parent=1 // pred_check_branch
      %18 = sbr.rel (0) target = $region9
    $region8: #{tpu_custom_call.1} parent=1 // pred_region
      _
    $region9: #{tpu_custom_call.1} parent=1 // pred_fallthru
      _
    // Predicated region
    $region10: #{tpu_custom_call.1} parent=1 // pred_check
      _
    $region11: #{tpu_custom_call.1} parent=1 // pred_check_branch
      %20 = sbr.rel (0) target = $region13
    $region12: #{tpu_custom_call.1} parent=1 // pred_region
      _
    $region13: #{tpu_custom_call.1} parent=1 // pred_fallthru
      _
    // Predicated region
    $region14: #{tpu_custom_call.1} parent=1 // pred_check
      _
    $region15: #{tpu_custom_call.1} parent=1 // pred_check_branch
      %22 = sbr.rel (0) target = $region17
    $region16: #{tpu_custom_call.1} parent=1 // pred_region
      _
    $region17: #{tpu_custom_call.1} parent=1 // pred_fallthru
      _
    // Predicated region
    $region18: #{tpu_custom_call.1} parent=1 // pred_check
      _
    $region19: #{tpu_custom_call.1} parent=1 // pred_check_branch
      %24 = sbr.rel (0) target = $region21
    $region20: #{tpu_custom_call.1} parent=1 // pred_region
      _
    $region21: #{tpu_custom_call.1} parent=1 // pred_fallthru
      _
    // Predicated region
    $region22: #{tpu_custom_call.1} parent=1 // pred_check
      _
    $region23: #{tpu_custom_call.1} parent=1 // pred_check_branch
      %26 = sbr.rel (0) target = $region25
    $region24: #{tpu_custom_call.1} parent=1 // pred_region
      _
    $region25: #{tpu_custom_call.1} parent=1 // pred_fallthru
      _
    // Predicated region
    $region26: #{tpu_custom_call.1} parent=1 // pred_check
      _
    $region27: #{tpu_custom_call.1} parent=1 // pred_check_branch
      %28 = sbr.rel (0) target = $region29
    $region28: #{tpu_custom_call.1} parent=1 // pred_region
      _
    $region29: #{tpu_custom_call.1} parent=1 // pred_fallthru
      _
    %v30 = vld [vmem:[%s0] sm:$0xf]
    %v31 = vld [vmem:[%s0 + $0x4] sm:$0xf]
    %v32 = vld [vmem:[%s0 + $0x8] sm:$0xf]
    %v33 = vld [vmem:[%s0 + $0xc] sm:$0x7]
    %v34 = vld [vmem:[%s1] sm:$0xf]
    %v35 = vld [vmem:[%s1 + $0x4] sm:$0xf]
    %v36 = vld [vmem:[%s1 + $0x8] sm:$0xf]
    %v37 = vld [vmem:[%s1 + $0xc] sm:$0xf]
    %v38 = vld [vmem:[%s1 + $0x10] sm:$0xf]
    %v39 = vld [vmem:[%s1 + $0x14] sm:$0xf]
    %v40 = vld [vmem:[%s1 + $0x18] sm:$0xf]
    %v41 = vld [vmem:[%s1 + $0x1c] sm:$0xf]
    %v42 = vld [vmem:[%s2] sm:$0xff]
    %v43 = vld [vmem:[%s2 + $0x8] sm:$0xff]
    %v44 = vld [vmem:[%s2 + $0x10] sm:$0xff]
    %v45 = vld [vmem:[%s2 + $0x18] sm:$0xff]
    %v46 = vld [vmem:[%s2 + $0x20] sm:$0xff]
    %v47 = vld [vmem:[%s2 + $0x28] sm:$0xff]
    %v48 = vld [vmem:[%s2 + $0x30] sm:$0xff]
    %v49 = vld [vmem:[%s2 + $0x38] sm:$0xff]
    %51 = vset.pattern.permute.xlu0 0
    %52 = vperm.xlu0 %51, %v42
    %v53 = vpop.permute.xlu0 %52
    %56 = vset.pattern.permute.xlu0 0
    %57 = vperm.xlu0 %56, %v43
    %v58 = vpop.permute.xlu0 %57
    %61 = vset.pattern.permute.xlu0 0
    %62 = vperm.xlu0 %61, %v44
    %v63 = vpop.permute.xlu0 %62
    %66 = vset.pattern.permute.xlu0 0
    %67 = vperm.xlu0 %66, %v45
    %v68 = vpop.permute.xlu0 %67
    %71 = vset.pattern.permute.xlu0 0
    %72 = vperm.xlu0 %71, %v46
    %v73 = vpop.permute.xlu0 %72
    %76 = vset.pattern.permute.xlu0 0
    %77 = vperm.xlu0 %76, %v47
    %v78 = vpop.permute.xlu0 %77
    %81 = vset.pattern.permute.xlu0 0
    %82 = vperm.xlu0 %81, %v48
    %v83 = vpop.permute.xlu0 %82
    %86 = vset.pattern.permute.xlu0 0
    %87 = vperm.xlu0 %86, %v49
    %v88 = vpop.permute.xlu0 %87
    %v98 = vunpack.c.l.b16 %v34
    %v99 = vunpack.c.l.b16 %v35
    %v100 = vunpack.c.l.b16 %v36
    %v101 = vunpack.c.l.b16 %v37
    %v102 = vunpack.c.l.b16 %v38
    %v103 = vunpack.c.l.b16 %v39
    %v104 = vunpack.c.l.b16 %v40
    %v105 = vunpack.c.l.b16 %v41
    %v106 = vpack.c.b16 %v99, %v98
    %v107 = vpack.c.b16 %v101, %v100
    %v108 = vpack.c.b16 %v103, %v102
    %v109 = vpack.c.b16 %v105, %v104
    %v114 = vunpack.c.l.b16 %v30
    %v115 = vunpack.c.l.b16 %v31
    %v116 = vunpack.c.l.b16 %v32
    %v117 = vunpack.c.l.b16 %v33
    %v118 = vpack.c.b16 %v115, %v114
    %v119 = vpack.c.b16 %v117, %v116
    %vm121 = vcmask 244736
    %v123 = vsel %vm121, %v106, 0
    %v126 = vsel %vm121, %v107, 0
    %v129 = vsel %vm121, %v108, 0
    %v132 = vsel %vm121, %v109, 0
    %vm134 = vcmask 1046528
    %v136 = vsel %vm134, %v119, 0
    %138 = vmatprep.subr.bf16.mxu0 0
    %139 = vmatpush1.bf16.msra.mxu0 %v118
    %140 = vmatprep.subr.bf16.mxu0 0
    %141 = vmatpush1.bf16.msra.mxu0 %v136
    %142 = vmatprep.subr.bf16.mxu0 0
    %143 = vmatpush1.bf16.msra.mxu0 0
    %144 = vmatprep.subr.bf16.mxu0 0
    %145 = vmatpush1.bf16.msra.mxu0 0
    %146 = vmatprep.subr.bf16.mxu0 0
    %147 = vmatpush1.bf16.msra.mxu0 0
    %148 = vmatprep.subr.bf16.mxu0 0
    %149 = vmatpush1.bf16.msra.mxu0 0
    %150 = vmatprep.subr.bf16.mxu0 0
    %151 = vmatpush1.bf16.msra.mxu0 0
    %152 = vmatprep.subr.bf16.mxu0 0
    %153 = vmatpush1.bf16.msra.mxu0 0
    %154 = vmatprep.subr.bf16.mxu0 0
    %155 = vmatpush1.bf16.msra.mxu0 0
    %156 = vmatprep.subr.bf16.mxu0 0
    %157 = vmatpush1.bf16.msra.mxu0 0
    %158 = vmatprep.subr.bf16.mxu0 0
    %159 = vmatpush1.bf16.msra.mxu0 0
    %160 = vmatprep.subr.bf16.mxu0 0
    %161 = vmatpush1.bf16.msra.mxu0 0
    %162 = vmatprep.subr.bf16.mxu0 0
    %163 = vmatpush1.bf16.msra.mxu0 0
    %164 = vmatprep.subr.bf16.mxu0 0
    %165 = vmatpush1.bf16.msra.mxu0 0
    %166 = vmatprep.subr.bf16.mxu0 0
    %167 = vmatpush1.bf16.msra.mxu0 0
    %168 = vmatprep.subr.bf16.mxu0 0
    %169 = vmatpush1.bf16.msra.mxu0 0
    %170 = vmatprep.mubr.bf16.mxu0 0
    %171 = vmatmul.mubr.bf16.gmra.mrb[0].mxu0 %v123
    %v172 = vpop.f32.mrb[0].mxu0
    %v173 = vadd.f32 %v53, %v172
    %v174 = vpop.f32.mrb[0].mxu0
    %v175 = vpop.f32.mrb[0].mxu0
    %v176 = vadd.f32 %v58, %v175
    %v177 = vpop.f32.mrb[0].mxu0
    %178 = vmatprep.mubr.bf16.mxu0 0
    %179 = vmatmul.mubr.bf16.gmra.mrb[0].mxu0 %v126
    %v180 = vpop.f32.mrb[0].mxu0
    %v181 = vadd.f32 %v63, %v180
    %v182 = vpop.f32.mrb[0].mxu0
    %v183 = vpop.f32.mrb[0].mxu0
    %v184 = vadd.f32 %v68, %v183
    %v185 = vpop.f32.mrb[0].mxu0
    %186 = vmatprep.mubr.bf16.mxu0 0
    %187 = vmatmul.mubr.bf16.gmra.mrb[0].mxu0 %v129
    %v188 = vpop.f32.mrb[0].mxu0
    %v189 = vadd.f32 %v73, %v188
    %v190 = vpop.f32.mrb[0].mxu0
    %v191 = vpop.f32.mrb[0].mxu0
    %v192 = vadd.f32 %v78, %v191
    %v193 = vpop.f32.mrb[0].mxu0
    %194 = vmatprep.mubr.bf16.mxu0 0
    %195 = vmatmul.mubr.bf16.gmra.mrb[0].mxu0 %v132
    %v196 = vpop.f32.mrb[0].mxu0
    %v197 = vadd.f32 %v83, %v196
    %v198 = vpop.f32.mrb[0].mxu0
    %v199 = vpop.f32.mrb[0].mxu0
    %v200 = vadd.f32 %v88, %v199
    %v201 = vpop.f32.mrb[0].mxu0
    %202 = vdwg.mxu0
    %v203 = vmax.f32 %v173, 0.0
    %v204 = vmax.f32 %v176, 0.0
    %v205 = vmax.f32 %v181, 0.0
    %v206 = vmax.f32 %v184, 0.0
    %v207 = vmax.f32 %v189, 0.0
    %v208 = vmax.f32 %v192, 0.0
    %v209 = vmax.f32 %v197, 0.0
    %v210 = vmax.f32 %v200, 0.0
    %v211 = vld [vmem:[%s3] sm:$0xf]
    %v212 = vld [vmem:[%s3 + $0x4] sm:$0xf]
    %v213 = vld [vmem:[%s3 + $0x8] sm:$0xf]
    %v214 = vld [vmem:[%s3 + $0xc] sm:$0xf]
    %v215 = vpack.c.bf16 %v204, %v203
    %v216 = vpack.c.bf16 %v206, %v205
    %v217 = vpack.c.bf16 %v208, %v207
    %v218 = vpack.c.bf16 %v210, %v209
    %v219 = vld [vmem:[%s4] sm:$0xff]
    %v220 = vld [vmem:[%s4 + $0x8] sm:$0xff]
    %v221 = vld [vmem:[%s4 + $0x10] sm:$0xff]
    %v222 = vld [vmem:[%s4 + $0x18] sm:$0xff]
    %224 = vset.pattern.permute.xlu0 0
    %225 = vperm.xlu0 %224, %v219
    %v226 = vpop.permute.xlu0 %225
    %229 = vset.pattern.permute.xlu0 0
    %230 = vperm.xlu0 %229, %v220
    %v231 = vpop.permute.xlu0 %230
    %234 = vset.pattern.permute.xlu0 0
    %235 = vperm.xlu0 %234, %v221
    %v236 = vpop.permute.xlu0 %235
    %239 = vset.pattern.permute.xlu0 0
    %240 = vperm.xlu0 %239, %v222
    %v241 = vpop.permute.xlu0 %240
    %v247 = vunpack.c.l.b16 %v211
    %v248 = vunpack.c.l.b16 %v212
    %v249 = vunpack.c.l.b16 %v213
    %v250 = vunpack.c.l.b16 %v214
    %v251 = vpack.c.b16 %v248, %v247
    %v252 = vpack.c.b16 %v250, %v249
    %vm253 = vcmask 523264
    %v255 = vsel %vm253, %v251, 0
    %v258 = vsel %vm253, %v252, 0
    %260 = vmatprep.subr.bf16.mxu0 0
    %261 = vmatpush1.bf16.msra.mxu0 %v215
    %262 = vmatprep.subr.bf16.mxu0 0
    %263 = vmatpush1.bf16.msra.mxu0 %v216
    %264 = vmatprep.subr.bf16.mxu0 0
    %265 = vmatpush1.bf16.msra.mxu0 %v217
    %266 = vmatprep.subr.bf16.mxu0 0
    %267 = vmatpush1.bf16.msra.mxu0 %v218
    %268 = vmatprep.subr.bf16.mxu0 0
    %269 = vmatpush1.bf16.msra.mxu0 0
    %270 = vmatprep.subr.bf16.mxu0 0
    %271 = vmatpush1.bf16.msra.mxu0 0
    %272 = vmatprep.subr.bf16.mxu0 0
    %273 = vmatpush1.bf16.msra.mxu0 0
    %274 = vmatprep.subr.bf16.mxu0 0
    %275 = vmatpush1.bf16.msra.mxu0 0
    %276 = vmatprep.subr.bf16.mxu0 0
    %277 = vmatpush1.bf16.msra.mxu0 0
    %278 = vmatprep.subr.bf16.mxu0 0
    %279 = vmatpush1.bf16.msra.mxu0 0
    %280 = vmatprep.subr.bf16.mxu0 0
    %281 = vmatpush1.bf16.msra.mxu0 0
    %282 = vmatprep.subr.bf16.mxu0 0
    %283 = vmatpush1.bf16.msra.mxu0 0
    %284 = vmatprep.subr.bf16.mxu0 0
    %285 = vmatpush1.bf16.msra.mxu0 0
    %286 = vmatprep.subr.bf16.mxu0 0
    %287 = vmatpush1.bf16.msra.mxu0 0
    %288 = vmatprep.subr.bf16.mxu0 0
    %289 = vmatpush1.bf16.msra.mxu0 0
    %290 = vmatprep.subr.bf16.mxu0 0
    %291 = vmatpush1.bf16.msra.mxu0 0
    %292 = vmatprep.mubr.bf16.mxu0 0
    %293 = vmatmul.mubr.bf16.gmra.mrb[0].mxu0 %v255
    %v294 = vpop.f32.mrb[0].mxu0
    %v295 = vadd.f32 %v226, %v294
    %v296 = vpop.f32.mrb[0].mxu0
    %v297 = vpop.f32.mrb[0].mxu0
    %v298 = vadd.f32 %v231, %v297
    %v299 = vpop.f32.mrb[0].mxu0
    %300 = vmatprep.mubr.bf16.mxu0 0
    %301 = vmatmul.mubr.bf16.gmra.mrb[0].mxu0 %v258
    %v302 = vpop.f32.mrb[0].mxu0
    %v303 = vadd.f32 %v236, %v302
    %v304 = vpop.f32.mrb[0].mxu0
    %v305 = vpop.f32.mrb[0].mxu0
    %v306 = vadd.f32 %v241, %v305
    %v307 = vpop.f32.mrb[0].mxu0
    %308 = vdwg.mxu0
    %v309 = vmax.f32 %v295, 0.0
    %v310 = vmax.f32 %v298, 0.0
    %v311 = vmax.f32 %v303, 0.0
    %v312 = vmax.f32 %v306, 0.0
    %v313 = vld [vmem:[%s5] sm:$0xff]
    %v314 = vld [vmem:[%s5 + $0x8] sm:$0xff]
    %v315 = vld [vmem:[%s5 + $0x10] sm:$0xff]
    %v316 = vld [vmem:[%s5 + $0x18] sm:$0xff]
    %318 = vset.pattern.permute.xlu0 0
    %319 = vperm.xlu0 %318, %v313
    %v320 = vpop.permute.xlu0 %319
    %323 = vset.pattern.permute.xlu0 0
    %324 = vperm.xlu0 %323, %v314
    %v325 = vpop.permute.xlu0 %324
    %328 = vset.pattern.permute.xlu0 0
    %329 = vperm.xlu0 %328, %v315
    %v330 = vpop.permute.xlu0 %329
    %333 = vset.pattern.permute.xlu0 0
    %334 = vperm.xlu0 %333, %v316
    %v335 = vpop.permute.xlu0 %334
    %v337 = vmul.f32 %v309, %v320
    %v338 = vmul.f32 %v310, %v325
    %v339 = vmul.f32 %v311, %v330
    %v340 = vmul.f32 %v312, %v335
    %vm341 = vcmask 64512
    %v342 = vsel %vm341, %v337, 0.0
    %v343 = vsel %vm341, %v338, 0.0
    %v344 = vadd.f32 %v342, %v343
    %v345 = vsel %vm341, %v339, 0.0
    %v346 = vadd.f32 %v344, %v345
    %v347 = vsel %vm341, %v340, 0.0
    %v348 = vadd.f32 %v346, %v347
    %v349 = vrot.slane %v348, 4
    %v350 = vadd.f32 %v348, %v349
    %v351 = vrot.slane %v350, 2
    %v352 = vadd.f32 %v350, %v351
    %v353 = vrot.slane %v352, 1
    %v354 = vadd.f32 %v352, %v353
    %v355 = vld [vmem:[#allocation2] sm:$0x1]
    %357 = vset.pattern.permute.xlu0 0
    %358 = vperm.xlu0 %357, %v355
    %v359 = vpop.permute.xlu0 %358
    %v361 = vlaneseq
    %v362 = vshrl.u32 %v361, 7
    %v363 = vsub.s32 0, %v362
    %v364 = vrot.slane %v359, %v363
    %v365 = vadd.f32 %v354, %v364
    %v366 = vsub.f32 0.0, %v365
    %v367 = vmul.f32 %v366, 1.442695
    %v368 = vpow.pop %v367
    %v369 = vadd.f32 %v368, 1.0
    %v370 = vrcp.pop %v369
    %vm371 = vcmask 57344
    %372 = vst.msk [vmem:[#allocation3] sm:$0x1] %vm371, %v370
    // Predicated region
    $region30: #{tpu_custom_call.1} parent=1 // pred_check
      _
    $region31: #{tpu_custom_call.1} parent=1 // pred_check_branch
      %374 = sbr.rel (0) target = $region33
    $region32: #{tpu_custom_call.1} parent=1 // pred_region
      %s376 = ssub.s32 16, 16
      %377 = vsyncadd [#allocation4], %s376
      %s379 = sshll.u32 [#allocation3], 4
      %s380 = int_to_ptr.vmem [resolvable:$true] %s379
      %382 = dma.vmem_to_hbm [thread:$0]  %s380, 16, %s7, [#allocation4]
    $region33: #{tpu_custom_call.1} parent=1 // pred_fallthru
      _
    // Predicated region
    $region34: #{tpu_custom_call.1} parent=1 // pred_check
      _
    $region35: #{tpu_custom_call.1} parent=1 // pred_check_branch
      %384 = sbr.rel (0) target = $region37
    $region36: #{tpu_custom_call.1} parent=1 // pred_region
      %385 = dma.done [#allocation4], 16
    $region37: #{tpu_custom_call.1} parent=1 // pred_fallthru
      _
    %386 = vsyncpa [#allocation4], 1

</llo_original>
